<compile_context>
chip_gen: v7x
topology: tpu7x:2x2x1
jax: 0.10.0
libtpu: 0.0.40
codegen_flags: <defaults>
</compile_context>

<pallas_src>
import functools

import jax
import jax.numpy as jnp
from jax.experimental import pallas as pl
from jax.experimental.pallas import tpu as pltpu


_SQRT_2_OVER_PI = 0.7978845608028654


def _gelu_tanh(v):
    # tanh-approximate GELU (tanh uses the EUP slot; lowers cleanly in Mosaic).
    # TODO(synk): PyTorch nn.GELU() default is the exact erf form; the tanh
    # approximation differs by ~1e-3 absolute at worst.
    return 0.5 * v * (1.0 + jnp.tanh(_SQRT_2_OVER_PI * (v + 0.044715 * v * v * v)))


def hyper_head_kernel(x_ref,            # (TN, C_in)
                      wA_ref, bA_ref,   # (C_in, 2H), (1, 2H)   fused fc11|fc21
                      wB_ref, bB_ref,   # (2H, n_cls+3), (1, n_cls+3)
                      scores_ref,       # (TN, 1)
                      cls_ref,          # (TN, n_cls)
                      *, n_cls):
    # Dropout layers are identity in eval mode.
    # TODO(synk): training-mode dropout would need pltpu.prng_seed +
    # pltpu.prng_random_bits masking with a 1/(1-p) rescale.
    x = x_ref[...].astype(jnp.float32)                         # f32 accumulate

    # Fused fc11|fc21 projection + GELU: one MXU matmul, (TN, 2H).
    h = _gelu_tanh(
        jnp.dot(x, wA_ref[...], preferred_element_type=jnp.float32)
        + bA_ref[...])

    # Fused fc12/fc22/fc32 head: one MXU matmul, (TN, n_cls + 3).
    # Column layout: [0, n_cls) = cls, n_cls = relative_score,
    #                n_cls+1 = wb weight, n_cls+2 = wb bias.
    out2 = (jnp.dot(h, wB_ref[...], preferred_element_type=jnp.float32)
            + bB_ref[...])

    cls = out2[:, :n_cls]
    rel = out2[:, n_cls:n_cls + 1]
    wb_w = out2[:, n_cls + 1:n_cls + 2]
    wb_b = out2[:, n_cls + 2:n_cls + 3]

    scores_ref[...] = (rel * wb_w + wb_b).astype(scores_ref.dtype)
    cls_ref[...] = cls.astype(cls_ref.dtype)


def hyper_head_forward(x, params, *, block_n=512):
    """x: (N, C_in). params: PyTorch-layout Linear weights/biases.

    params keys: w11 (H, C_in), b11 (H,), w12 (1, H), b12 (1,),
                 w21 (H, C_in), b21 (H,), w22 (50, H), b22 (50,),
                 w32 (2, H), b32 (2,)
    Returns (scores (N, 1), cls (N, 50)).
    """
    N, C_in = x.shape
    H = params["w11"].shape[0]
    n_cls = params["w22"].shape[0]
    f32 = jnp.float32

    # --- One-time fused weight prep outside the kernel (weights are tiny). ---
    # wA = [fc11ᵀ | fc21ᵀ]  -> (C_in, 2H);   bA = [b11 | b21] -> (1, 2H)
    wA = jnp.concatenate(
        [params["w11"].T.astype(f32), params["w21"].T.astype(f32)], axis=1)
    bA = jnp.concatenate(
        [params["b11"].reshape(1, H), params["b21"].reshape(1, H)],
        axis=1).astype(f32)

    # wB (2H, n_cls+3) block structure (see kernel column layout):
    w12_t = params["w12"].reshape(1, H).T.astype(f32)          # (H, 1)
    w22_t = params["w22"].T.astype(f32)                        # (H, n_cls)
    w32_t = params["w32"].T.astype(f32)                        # (H, 2)
    top = jnp.concatenate(                                     # h1 rows
        [jnp.zeros((H, n_cls), f32), w12_t, jnp.zeros((H, 2), f32)], axis=1)
    bot = jnp.concatenate(                                     # f rows
        [w22_t, jnp.zeros((H, 1), f32), w32_t], axis=1)
    wB = jnp.concatenate([top, bot], axis=0)                   # (2H, n_cls+3)
    bB = jnp.concatenate(
        [params["b22"].reshape(1, n_cls),
         params["b12"].reshape(1, 1),
         params["b32"].reshape(1, 2)], axis=1).astype(f32)     # (1, n_cls+3)

    # Batch tile: largest clean tile; sublane dim must be a multiple of 8 or
    # equal to the full batch extent ((8, 128) rule).
    tn = min(block_n, N)
    if tn != N and (N % tn != 0 or tn % 8 != 0):
        tn = N
    grid = (pl.cdiv(N, tn),)

    def resident(arr):
        # Same block every grid step -> DMA'd once, stays resident in VMEM.
        return pl.BlockSpec(arr.shape, lambda n: (0, 0))

    itemsize = jnp.dtype(x.dtype).itemsize
    weight_bytes = sum(int(a.size) * 4 for a in (wA, bA, wB, bB))
    cost = pl.CostEstimate(
        flops=2 * N * (C_in * 2 * H + 2 * H * (n_cls + 3)),
        transcendentals=2 * N * H,                             # tanh in GELU
        bytes_accessed=(N * C_in * itemsize + weight_bytes
                        + N * (1 + n_cls) * itemsize),
    )

    kernel = functools.partial(hyper_head_kernel, n_cls=n_cls)

    scores, cls = pl.pallas_call(
        kernel,
        out_shape=(jax.ShapeDtypeStruct((N, 1), x.dtype),
                   jax.ShapeDtypeStruct((N, n_cls), x.dtype)),
        grid=grid,
        in_specs=[
            pl.BlockSpec((tn, C_in), lambda n: (n, 0)),        # x streams per step
            resident(wA), resident(bA),
            resident(wB), resident(bB),
        ],
        out_specs=(
            pl.BlockSpec((tn, 1), lambda n: (n, 0)),
            pl.BlockSpec((tn, n_cls), lambda n: (n, 0)),
        ),
        compiler_params=pltpu.CompilerParams(
            dimension_semantics=("parallel",),                 # batch split across TCs
            vmem_limit_bytes=32 * 1024 * 1024,
        ),
        cost_estimate=cost,
    )(x, wA, bA, wB, bB)

    return scores, cls


if __name__ == "__main__":
    # Small shapes consistent with the module: batch=16, in_channels=64, hidden=32.
    N, C_IN, HID = 16, 64, 32

    key = jax.random.PRNGKey(0)
    keys = jax.random.split(key, 11)
    x = jax.random.normal(keys[0], (N, C_IN), dtype=jnp.float32)

    def lin(kw, kb, out_f, in_f):
        w = jax.random.normal(kw, (out_f, in_f), dtype=jnp.float32) * 0.05
        b = jax.random.normal(kb, (out_f,), dtype=jnp.float32) * 0.01
        return w, b

    w11, b11 = lin(keys[1], keys[2], HID, C_IN)
    w12, b12 = lin(keys[3], keys[4], 1, HID)
    w21, b21 = lin(keys[5], keys[6], HID, C_IN)
    w22, b22 = lin(keys[7], keys[8], 50, HID)
    w32, b32 = lin(keys[9], keys[10], 2, HID)
    params = dict(w11=w11, b11=b11, w12=w12, b12=b12,
                  w21=w21, b21=b21, w22=w22, b22=b22, w32=w32, b32=b32)

    scores, cls = hyper_head_forward(x, params)
    scores, cls = jax.block_until_ready((scores, cls))

    # Pure-JAX reference (same tanh-GELU, dropout = identity in eval mode).
    def gelu_ref(v):
        return 0.5 * v * (1.0 + jnp.tanh(_SQRT_2_OVER_PI * (v + 0.044715 * v ** 3)))

    h1 = gelu_ref(x @ w11.T + b11)
    rel = h1 @ w12.T + b12
    f = gelu_ref(x @ w21.T + b21)
    cls_ref = f @ w22.T + b22
    wb = f @ w32.T + b32
    scores_ref = rel * wb[:, :1] + wb[:, 1:]

    assert jnp.allclose(scores, scores_ref, atol=1e-5, rtol=1e-5), "scores mismatch"
    assert jnp.allclose(cls, cls_ref, atol=1e-5, rtol=1e-5), "cls mismatch"

    print("KERNEL_OK")
</pallas_src>

<mosaic_0001>
module attributes {stable_mosaic.version = 11 : i64} {
  func.func @hyper_head_kernel(%arg0: i32, %arg1: memref<16x64xf32, #tpu.memory_space<vmem>>, %arg2: memref<64x64xf32, #tpu.memory_space<vmem>>, %arg3: memref<1x64xf32, #tpu.memory_space<vmem>>, %arg4: memref<64x53xf32, #tpu.memory_space<vmem>>, %arg5: memref<1x53xf32, #tpu.memory_space<vmem>>, %arg6: memref<16x1xf32, #tpu.memory_space<vmem>>, %arg7: memref<16x50xf32, #tpu.memory_space<vmem>>) attributes {dimension_semantics = [#tpu.dimension_semantics<parallel>], iteration_bounds = array<i64: 1>, scalar_prefetch = 0 : i64, scratch_operands = 0 : i64, tpu.core_type = #tpu.core_type<tc>, window_params = [{transform_indices = @transform_0, window_bounds = array<i64: 16, 64>}, {pipeline_mode = #tpu.pipeline_mode<synchronous>, transform_indices = @transform_1, window_bounds = array<i64: 64, 64>}, {pipeline_mode = #tpu.pipeline_mode<synchronous>, transform_indices = @transform_2, window_bounds = array<i64: 1, 64>}, {pipeline_mode = #tpu.pipeline_mode<synchronous>, transform_indices = @transform_3, window_bounds = array<i64: 64, 53>}, {pipeline_mode = #tpu.pipeline_mode<synchronous>, transform_indices = @transform_4, window_bounds = array<i64: 1, 53>}, {transform_indices = @transform_5, window_bounds = array<i64: 16, 1>}, {transform_indices = @transform_6, window_bounds = array<i64: 16, 50>}]} {
    %c0 = arith.constant 0 : index
    %c0_0 = arith.constant 0 : index
    %0 = vector.load %arg1[%c0, %c0_0] : memref<16x64xf32, #tpu.memory_space<vmem>>, vector<16x64xf32>
    %c0_1 = arith.constant 0 : index
    %c0_2 = arith.constant 0 : index
    %1 = vector.load %arg2[%c0_1, %c0_2] : memref<64x64xf32, #tpu.memory_space<vmem>>, vector<64x64xf32>
    %cst = arith.constant dense<0.000000e+00> : vector<16x64xf32>
    %2 = tpu.matmul %0, %1, %cst {dimension_numbers = #tpu.dot_dimension_numbers<[1], [0], [0], [1], [0, 0, 1, 1], [], []>} : vector<16x64xf32>, vector<64x64xf32>, vector<16x64xf32> -> vector<16x64xf32>
    %c0_3 = arith.constant 0 : index
    %c0_4 = arith.constant 0 : index
    %3 = vector.load %arg3[%c0_3, %c0_4] : memref<1x64xf32, #tpu.memory_space<vmem>>, vector<1x64xf32>
    %4 = vector.broadcast %3 : vector<1x64xf32> to vector<16x64xf32>
    %5 = arith.addf %2, %4 : vector<16x64xf32>
    %cst_5 = arith.constant 5.000000e-01 : f32
    %6 = vector.broadcast %cst_5 : f32 to vector<16x64xf32>
    %7 = arith.mulf %6, %5 : vector<16x64xf32>
    %cst_6 = arith.constant 4.471500e-02 : f32
    %8 = vector.broadcast %cst_6 : f32 to vector<16x64xf32>
    %9 = arith.mulf %8, %5 : vector<16x64xf32>
    %10 = arith.mulf %9, %5 : vector<16x64xf32>
    %11 = arith.mulf %10, %5 : vector<16x64xf32>
    %12 = arith.addf %5, %11 : vector<16x64xf32>
    %cst_7 = arith.constant 0.797884583 : f32
    %13 = vector.broadcast %cst_7 : f32 to vector<16x64xf32>
    %14 = arith.mulf %13, %12 : vector<16x64xf32>
    %15 = math.tanh %14 : vector<16x64xf32>
    %cst_8 = arith.constant 1.000000e+00 : f32
    %16 = vector.broadcast %cst_8 : f32 to vector<16x64xf32>
    %17 = arith.addf %16, %15 : vector<16x64xf32>
    %18 = arith.mulf %7, %17 : vector<16x64xf32>
    %c0_9 = arith.constant 0 : index
    %c0_10 = arith.constant 0 : index
    %19 = vector.load %arg4[%c0_9, %c0_10] : memref<64x53xf32, #tpu.memory_space<vmem>>, vector<64x53xf32>
    %cst_11 = arith.constant dense<0.000000e+00> : vector<16x53xf32>
    %20 = tpu.matmul %18, %19, %cst_11 {dimension_numbers = #tpu.dot_dimension_numbers<[1], [0], [0], [1], [0, 0, 1, 1], [], []>} : vector<16x64xf32>, vector<64x53xf32>, vector<16x53xf32> -> vector<16x53xf32>
    %c0_12 = arith.constant 0 : index
    %c0_13 = arith.constant 0 : index
    %21 = vector.load %arg5[%c0_12, %c0_13] : memref<1x53xf32, #tpu.memory_space<vmem>>, vector<1x53xf32>
    %22 = vector.broadcast %21 : vector<1x53xf32> to vector<16x53xf32>
    %23 = arith.addf %20, %22 : vector<16x53xf32>
    %24 = vector.extract_strided_slice %23 {offsets = [0, 0], sizes = [16, 50], strides = [1, 1]} : vector<16x53xf32> to vector<16x50xf32>
    %25 = vector.extract_strided_slice %23 {offsets = [0, 50], sizes = [16, 1], strides = [1, 1]} : vector<16x53xf32> to vector<16x1xf32>
    %26 = vector.extract_strided_slice %23 {offsets = [0, 51], sizes = [16, 1], strides = [1, 1]} : vector<16x53xf32> to vector<16x1xf32>
    %27 = vector.extract_strided_slice %23 {offsets = [0, 52], sizes = [16, 1], strides = [1, 1]} : vector<16x53xf32> to vector<16x1xf32>
    %28 = arith.mulf %25, %26 : vector<16x1xf32>
    %29 = arith.addf %28, %27 : vector<16x1xf32>
    %c0_14 = arith.constant 0 : index
    %c0_15 = arith.constant 0 : index
    %30 = vector.load %arg6[%c0_14, %c0_15] : memref<16x1xf32, #tpu.memory_space<vmem>>, vector<16x1xf32>
    tpu.vector_store %arg6[%c0_14, %c0_15], %29 {strides = array<i32>} : memref<16x1xf32, #tpu.memory_space<vmem>>, vector<16x1xf32>,
    %c0_16 = arith.constant 0 : index
    %c0_17 = arith.constant 0 : index
    %31 = vector.load %arg7[%c0_16, %c0_17] : memref<16x50xf32, #tpu.memory_space<vmem>>, vector<16x50xf32>
    tpu.vector_store %arg7[%c0_16, %c0_17], %24 {strides = array<i32>} : memref<16x50xf32, #tpu.memory_space<vmem>>, vector<16x50xf32>,
    return
  }
  func.func @transform_0(%arg0: i32) -> (i32, i32) {
    %c0_i32 = arith.constant 0 : i32
    %c0_i32_0 = arith.constant 0 : i32
    return %arg0, %c0_i32 : i32, i32
  }
  func.func @transform_1(%arg0: i32) -> (i32, i32) {
    %c0_i32 = arith.constant 0 : i32
    %c0_i32_0 = arith.constant 0 : i32
    %c0_i32_1 = arith.constant 0 : i32
    return %c0_i32, %c0_i32_0 : i32, i32
  }
  func.func @transform_2(%arg0: i32) -> (i32, i32) {
    %c0_i32 = arith.constant 0 : i32
    %c0_i32_0 = arith.constant 0 : i32
    %c0_i32_1 = arith.constant 0 : i32
    return %c0_i32, %c0_i32_0 : i32, i32
  }
  func.func @transform_3(%arg0: i32) -> (i32, i32) {
    %c0_i32 = arith.constant 0 : i32
    %c0_i32_0 = arith.constant 0 : i32
    %c0_i32_1 = arith.constant 0 : i32
    return %c0_i32, %c0_i32_0 : i32, i32
  }
  func.func @transform_4(%arg0: i32) -> (i32, i32) {
    %c0_i32 = arith.constant 0 : i32
    %c0_i32_0 = arith.constant 0 : i32
    %c0_i32_1 = arith.constant 0 : i32
    return %c0_i32, %c0_i32_0 : i32, i32
  }
  func.func @transform_5(%arg0: i32) -> (i32, i32) {
    %c0_i32 = arith.constant 0 : i32
    %c0_i32_0 = arith.constant 0 : i32
    return %arg0, %c0_i32 : i32, i32
  }
  func.func @transform_6(%arg0: i32) -> (i32, i32) {
    %c0_i32 = arith.constant 0 : i32
    %c0_i32_0 = arith.constant 0 : i32
    return %arg0, %c0_i32 : i32, i32
  }
}

</mosaic_0001>

<llo_original>
// kernel: tpu_custom_call.1
$region0: #{tpu_custom_call.1}
  #allocation0 [shape = 'u32[]', space=smem, size = 0x4, offset = 0x4, fixed_abs, tag = 'smem constant byte address 0x4 - core index']
  #allocation1 [shape = 'u32[144,128]{1,0:T(1,128)}', space=vmem, size = 0x12000, scoped, tag = 'internal scratch']
  %s0 = inlined_call_operand.vmem [shape: f32[16,64], index: 0, kind: input, shape index: {}]
  %s1 = inlined_call_operand.vmem [shape: f32[64,64], index: 1, kind: input, shape index: {}]
  %s2 = inlined_call_operand.vmem [shape: f32[1,64], index: 2, kind: input, shape index: {}]
  %s3 = inlined_call_operand.vmem [shape: f32[64,53], index: 3, kind: input, shape index: {}]
  %s4 = inlined_call_operand.vmem [shape: f32[1,53], index: 4, kind: input, shape index: {}]
  %s5 = inlined_call_operand.vmem [shape: f32[16,1], index: 5, kind: output, shape index: {0}]
  %s6 = inlined_call_operand.hbm [shape: f32[16,50], index: 6, kind: output, shape index: {1}]
  %7 = xla_tuple %s5, %s6
  %s8 = sld [smem:[#allocation0]]
  $region38: #{tpu_custom_call.1} parent=0
    _
  %s10 = ssub.s32 1, %s8
  %s11 = scalar_select 0, %s10, %s8
  $region1: #{tpu_custom_call.1} parent=0
    #allocation2 [shape = 'u8[8192]{0}', space=vmem, size = 0x2000, scoped, tag = 'output window, operand 1, single buffered']
    #allocation3 [shape = 's32[1]{0}', space=sflag, size = 0x4, scoped, tag = 'scoped memory for tpu_custom_call.1']
    %12 = vsyncpa [#allocation3], 0
    // Predicated region
    $region2: #{tpu_custom_call.1} parent=1 // pred_check
      _
    $region3: #{tpu_custom_call.1} parent=1 // pred_check_branch
      %14 = sbr.rel (0) target = $region5
    $region4: #{tpu_custom_call.1} parent=1 // pred_region
      _
    $region5: #{tpu_custom_call.1} parent=1 // pred_fallthru
      _
    // Predicated region
    $region6: #{tpu_custom_call.1} parent=1 // pred_check
      _
    $region7: #{tpu_custom_call.1} parent=1 // pred_check_branch
      %16 = sbr.rel (0) target = $region9
    $region8: #{tpu_custom_call.1} parent=1 // pred_region
      _
    $region9: #{tpu_custom_call.1} parent=1 // pred_fallthru
      _
    // Predicated region
    $region10: #{tpu_custom_call.1} parent=1 // pred_check
      _
    $region11: #{tpu_custom_call.1} parent=1 // pred_check_branch
      %18 = sbr.rel (0) target = $region13
    $region12: #{tpu_custom_call.1} parent=1 // pred_region
      _
    $region13: #{tpu_custom_call.1} parent=1 // pred_fallthru
      _
    // Predicated region
    $region14: #{tpu_custom_call.1} parent=1 // pred_check
      _
    $region15: #{tpu_custom_call.1} parent=1 // pred_check_branch
      %20 = sbr.rel (0) target = $region17
    $region16: #{tpu_custom_call.1} parent=1 // pred_region
      _
    $region17: #{tpu_custom_call.1} parent=1 // pred_fallthru
      _
    // Predicated region
    $region18: #{tpu_custom_call.1} parent=1 // pred_check
      _
    $region19: #{tpu_custom_call.1} parent=1 // pred_check_branch
      %22 = sbr.rel (0) target = $region21
    $region20: #{tpu_custom_call.1} parent=1 // pred_region
      _
    $region21: #{tpu_custom_call.1} parent=1 // pred_fallthru
      _
    %v23 = vld [vmem:[%s0] sm:$0xff]
    %v24 = vld [vmem:[%s0 + $0x8] sm:$0xff]
    %v25 = vld [vmem:[%s1] sm:$0xff]
    %v26 = vld [vmem:[%s1 + $0x8] sm:$0xff]
    %v27 = vld [vmem:[%s1 + $0x10] sm:$0xff]
    %v28 = vld [vmem:[%s1 + $0x18] sm:$0xff]
    %v29 = vld [vmem:[%s1 + $0x20] sm:$0xff]
    %v30 = vld [vmem:[%s1 + $0x28] sm:$0xff]
    %v31 = vld [vmem:[%s1 + $0x30] sm:$0xff]
    %v32 = vld [vmem:[%s1 + $0x38] sm:$0xff]
    %v33 = vld [vmem:[%s2] sm:$0x1]
    %v35 = vlaneseq
    %v36 = vshrl.u32 %v35, 7
    %v37 = vsub.s32 0, %v36
    %v38 = vrot.slane %v33, %v37
    %vm40 = vcmask 523264
    %v42 = vsel %vm40, %v23, 0
    %v45 = vsel %vm40, %v24, 0
    %47 = vmatprep.subr.mxu0 0.0
    %48 = vmatpush1.msra.mxu0 %v25
    %49 = vmatprep.subr.mxu0 0.0
    %50 = vmatpush1.msra.mxu0 %v26
    %51 = vmatprep.subr.mxu0 0.0
    %52 = vmatpush1.msra.mxu0 %v27
    %53 = vmatprep.subr.mxu0 0.0
    %54 = vmatpush1.msra.mxu0 %v28
    %55 = vmatprep.subr.mxu0 0.0
    %56 = vmatpush1.msra.mxu0 %v29
    %57 = vmatprep.subr.mxu0 0.0
    %58 = vmatpush1.msra.mxu0 %v30
    %59 = vmatprep.subr.mxu0 0.0
    %60 = vmatpush1.msra.mxu0 %v31
    %61 = vmatprep.subr.mxu0 0.0
    %62 = vmatpush1.msra.mxu0 %v32
    %63 = vmatprep.subr.mxu0 0.0
    %64 = vmatpush1.msra.mxu0 0.0
    %65 = vmatprep.subr.mxu0 0.0
    %66 = vmatpush1.msra.mxu0 0.0
    %67 = vmatprep.subr.mxu0 0.0
    %68 = vmatpush1.msra.mxu0 0.0
    %69 = vmatprep.subr.mxu0 0.0
    %70 = vmatpush1.msra.mxu0 0.0
    %71 = vmatprep.subr.mxu0 0.0
    %72 = vmatpush1.msra.mxu0 0.0
    %73 = vmatprep.subr.mxu0 0.0
    %74 = vmatpush1.msra.mxu0 0.0
    %75 = vmatprep.subr.mxu0 0.0
    %76 = vmatpush1.msra.mxu0 0.0
    %77 = vmatprep.subr.mxu0 0.0
    %78 = vmatpush1.msra.mxu0 0.0
    %79 = vmatprep.subr.mxu0 0.0
    %80 = vmatpush1.msra.mxu0 0.0
    %81 = vmatprep.subr.mxu0 0.0
    %82 = vmatpush1.msra.mxu0 0.0
    %83 = vmatprep.subr.mxu0 0.0
    %84 = vmatpush1.msra.mxu0 0.0
    %85 = vmatprep.subr.mxu0 0.0
    %86 = vmatpush1.msra.mxu0 0.0
    %87 = vmatprep.subr.mxu0 0.0
    %88 = vmatpush1.msra.mxu0 0.0
    %89 = vmatprep.subr.mxu0 0.0
    %90 = vmatpush1.msra.mxu0 0.0
    %91 = vmatprep.subr.mxu0 0.0
    %92 = vmatpush1.msra.mxu0 0.0
    %93 = vmatprep.subr.mxu0 0.0
    %94 = vmatpush1.msra.mxu0 0.0
    %95 = vmatprep.subr.mxu0 0.0
    %96 = vmatpush1.msra.mxu0 0.0
    %97 = vmatprep.subr.mxu0 0.0
    %98 = vmatpush1.msra.mxu0 0.0
    %99 = vmatprep.subr.mxu0 0.0
    %100 = vmatpush1.msra.mxu0 0.0
    %101 = vmatprep.subr.mxu0 0.0
    %102 = vmatpush1.msra.mxu0 0.0
    %103 = vmatprep.subr.mxu0 0.0
    %104 = vmatpush1.msra.mxu0 0.0
    %105 = vmatprep.subr.mxu0 0.0
    %106 = vmatpush1.msra.mxu0 0.0
    %107 = vmatprep.subr.mxu0 0.0
    %108 = vmatpush1.msra.mxu0 0.0
    %109 = vmatprep.subr.mxu0 0.0
    %110 = vmatpush1.msra.mxu0 0.0
    %111 = vmatprep.mubr.f32.mxu0 0.0
    %112 = vmatmul.mubr.f32.gmra.mrb[0].mxu0 %v42
    %v113 = vpop.f32.mrb[0].mxu0
    %v114 = vadd.f32 %v38, %v113
    %v115 = vpop.f32.mrb[0].mxu0
    %116 = vmatprep.mubr.f32.mxu0 0.0
    %117 = vmatmul.mubr.f32.gmra.mrb[0].mxu0 %v45
    %v118 = vpop.f32.mrb[0].mxu0
    %v119 = vadd.f32 %v38, %v118
    %v120 = vpop.f32.mrb[0].mxu0
    %121 = vdwg.mxu0
    %v122 = vmul.f32 %v114, 0.5
    %v123 = vmul.f32 %v119, 0.5
    %v124 = vmul.f32 %v114, 0.044715
    %v125 = vmul.f32 %v119, 0.044715
    %v126 = vmul.f32 %v124, %v114
    %v127 = vmul.f32 %v125, %v119
    %v128 = vmul.f32 %v126, %v114
    %v129 = vmul.f32 %v127, %v119
    %v130 = vadd.f32 %v114, %v128
    %v131 = vadd.f32 %v119, %v129
    %v132 = vmul.f32 %v130, 0.7978846
    %v133 = vmul.f32 %v131, 0.7978846
    %v134 = vtanh.pop %v132
    %v135 = vtanh.pop %v133
    %v136 = vadd.f32 %v134, 1.0
    %v137 = vadd.f32 %v135, 1.0
    %v138 = vmul.f32 %v122, %v136
    %v139 = vmul.f32 %v123, %v137
    %v140 = vld [vmem:[%s3] sm:$0xff]
    %v141 = vld [vmem:[%s3 + $0x8] sm:$0xff]
    %v142 = vld [vmem:[%s3 + $0x10] sm:$0xff]
    %v143 = vld [vmem:[%s3 + $0x18] sm:$0xff]
    %v144 = vld [vmem:[%s3 + $0x20] sm:$0xff]
    %v145 = vld [vmem:[%s3 + $0x28] sm:$0xff]
    %v146 = vld [vmem:[%s3 + $0x30] sm:$0xff]
    %v147 = vld [vmem:[%s3 + $0x38] sm:$0xff]
    %v148 = vld [vmem:[%s4] sm:$0x1]
    %v150 = vlaneseq
    %v151 = vshrl.u32 %v150, 7
    %v152 = vsub.s32 0, %v151
    %v153 = vrot.slane %v148, %v152
    %v156 = vsel %vm40, %v138, 0
    %v159 = vsel %vm40, %v139, 0
    %161 = vmatprep.subr.mxu0 0.0
    %162 = vmatpush1.msra.mxu0 %v140
    %163 = vmatprep.subr.mxu0 0.0
    %164 = vmatpush1.msra.mxu0 %v141
    %165 = vmatprep.subr.mxu0 0.0
    %166 = vmatpush1.msra.mxu0 %v142
    %167 = vmatprep.subr.mxu0 0.0
    %168 = vmatpush1.msra.mxu0 %v143
    %169 = vmatprep.subr.mxu0 0.0
    %170 = vmatpush1.msra.mxu0 %v144
    %171 = vmatprep.subr.mxu0 0.0
    %172 = vmatpush1.msra.mxu0 %v145
    %173 = vmatprep.subr.mxu0 0.0
    %174 = vmatpush1.msra.mxu0 %v146
    %175 = vmatprep.subr.mxu0 0.0
    %176 = vmatpush1.msra.mxu0 %v147
    %177 = vmatprep.subr.mxu0 0.0
    %178 = vmatpush1.msra.mxu0 0.0
    %179 = vmatprep.subr.mxu0 0.0
    %180 = vmatpush1.msra.mxu0 0.0
    %181 = vmatprep.subr.mxu0 0.0
    %182 = vmatpush1.msra.mxu0 0.0
    %183 = vmatprep.subr.mxu0 0.0
    %184 = vmatpush1.msra.mxu0 0.0
    %185 = vmatprep.subr.mxu0 0.0
    %186 = vmatpush1.msra.mxu0 0.0
    %187 = vmatprep.subr.mxu0 0.0
    %188 = vmatpush1.msra.mxu0 0.0
    %189 = vmatprep.subr.mxu0 0.0
    %190 = vmatpush1.msra.mxu0 0.0
    %191 = vmatprep.subr.mxu0 0.0
    %192 = vmatpush1.msra.mxu0 0.0
    %193 = vmatprep.subr.mxu0 0.0
    %194 = vmatpush1.msra.mxu0 0.0
    %195 = vmatprep.subr.mxu0 0.0
    %196 = vmatpush1.msra.mxu0 0.0
    %197 = vmatprep.subr.mxu0 0.0
    %198 = vmatpush1.msra.mxu0 0.0
    %199 = vmatprep.subr.mxu0 0.0
    %200 = vmatpush1.msra.mxu0 0.0
    %201 = vmatprep.subr.mxu0 0.0
    %202 = vmatpush1.msra.mxu0 0.0
    %203 = vmatprep.subr.mxu0 0.0
    %204 = vmatpush1.msra.mxu0 0.0
    %205 = vmatprep.subr.mxu0 0.0
    %206 = vmatpush1.msra.mxu0 0.0
    %207 = vmatprep.subr.mxu0 0.0
    %208 = vmatpush1.msra.mxu0 0.0
    %209 = vmatprep.subr.mxu0 0.0
    %210 = vmatpush1.msra.mxu0 0.0
    %211 = vmatprep.subr.mxu0 0.0
    %212 = vmatpush1.msra.mxu0 0.0
    %213 = vmatprep.subr.mxu0 0.0
    %214 = vmatpush1.msra.mxu0 0.0
    %215 = vmatprep.subr.mxu0 0.0
    %216 = vmatpush1.msra.mxu0 0.0
    %217 = vmatprep.subr.mxu0 0.0
    %218 = vmatpush1.msra.mxu0 0.0
    %219 = vmatprep.subr.mxu0 0.0
    %220 = vmatpush1.msra.mxu0 0.0
    %221 = vmatprep.subr.mxu0 0.0
    %222 = vmatpush1.msra.mxu0 0.0
    %223 = vmatprep.subr.mxu0 0.0
    %224 = vmatpush1.msra.mxu0 0.0
    %225 = vmatprep.mubr.f32.mxu0 0.0
    %226 = vmatmul.mubr.f32.gmra.mrb[0].mxu0 %v156
    %v227 = vpop.f32.mrb[0].mxu0
    %v228 = vadd.f32 %v153, %v227
    %v229 = vpop.f32.mrb[0].mxu0
    %230 = vmatprep.mubr.f32.mxu0 0.0
    %231 = vmatmul.mubr.f32.gmra.mrb[0].mxu0 %v159
    %v232 = vpop.f32.mrb[0].mxu0
    %v233 = vadd.f32 %v153, %v232
    %v234 = vpop.f32.mrb[0].mxu0
    %235 = vdwg.mxu0
    %238 = vrot.lane.b32.xlu0 %v228, 127
    %v239 = vpop.permute.xlu0 %238
    %240 = vrot.lane.b32.xlu0 %v233, 127
    %v241 = vpop.permute.xlu0 %240
    %v244 = vmul.f32 %v228, %v239
    %v245 = vmul.f32 %v233, %v241
    %246 = vrot.lane.b32.xlu0 %v228, 126
    %v247 = vpop.permute.xlu0 %246
    %248 = vrot.lane.b32.xlu0 %v233, 126
    %v249 = vpop.permute.xlu0 %248
    %v252 = vadd.f32 %v244, %v247
    %v253 = vadd.f32 %v245, %v249
    %256 = vrot.lane.b32.xlu0 %v252, 78
    %v257 = vpop.permute.xlu0 %256
    %258 = vrot.lane.b32.xlu0 %v253, 78
    %v259 = vpop.permute.xlu0 %258
    %vm262 = vcmask 7168
    %263 = vst.msk [vmem:[%s5] sm:$0xff] %vm262, %v257
    %264 = vst.msk [vmem:[%s5 + $0x8] sm:$0xff] %vm262, %v259
    %vm265 = vcmask 408576
    %266 = vst.msk [vmem:[#allocation2] sm:$0xff] %vm265, %v228
    %267 = vst.msk [vmem:[#allocation2 + $0x8] sm:$0xff] %vm265, %v233
    // Predicated region
    $region22: #{tpu_custom_call.1} parent=1 // pred_check
      _
    $region23: #{tpu_custom_call.1} parent=1 // pred_check_branch
      %269 = sbr.rel (0) target = $region25
    $region24: #{tpu_custom_call.1} parent=1 // pred_region
      _
    $region25: #{tpu_custom_call.1} parent=1 // pred_fallthru
      _
    // Predicated region
    $region26: #{tpu_custom_call.1} parent=1 // pred_check
      _
    $region27: #{tpu_custom_call.1} parent=1 // pred_check_branch
      %271 = sbr.rel (0) target = $region29
    $region28: #{tpu_custom_call.1} parent=1 // pred_region
      %s273 = ssub.s32 256, 256
      %274 = vsyncadd [#allocation3], %s273
      %s275 = sshll.u32 [#allocation2], 4
      %s276 = int_to_ptr.vmem [resolvable:$true] %s275
      %281 = dma.vmem_to_hbm [thread:$0]  %s276, 256, %s6, [#allocation3], 128, 128, 8
    $region29: #{tpu_custom_call.1} parent=1 // pred_fallthru
      _
    // Predicated region
    $region30: #{tpu_custom_call.1} parent=1 // pred_check
      _
    $region31: #{tpu_custom_call.1} parent=1 // pred_check_branch
      %283 = sbr.rel (0) target = $region33
    $region32: #{tpu_custom_call.1} parent=1 // pred_region
      _
    $region33: #{tpu_custom_call.1} parent=1 // pred_fallthru
      _
    // Predicated region
    $region34: #{tpu_custom_call.1} parent=1 // pred_check
      _
    $region35: #{tpu_custom_call.1} parent=1 // pred_check_branch
      %285 = sbr.rel (0) target = $region37
    $region36: #{tpu_custom_call.1} parent=1 // pred_region
      %286 = dma.done [#allocation3], 256
    $region37: #{tpu_custom_call.1} parent=1 // pred_fallthru
      _
    %287 = vsyncpa [#allocation3], 1

</llo_original>
